<compile_context>
chip_gen: v7x
topology: tpu7x:2x2x1
jax: 0.10.0
libtpu: 0.0.40
codegen_flags: <defaults>
</compile_context>

<pallas_src>
import functools

import jax
import jax.numpy as jnp
from jax.experimental import pallas as pl
from jax.experimental.pallas import tpu as pltpu

LANE = 128
_MIB = 1024 * 1024


def _cdiv(a, b):
    return -(-a // b)


def _gen_params():
    """Generation-aware (block_bytes_per_input, vmem_limit_bytes)."""
    vmem_cap = None
    try:
        info = pltpu.get_tpu_info()
        for name in ("vmem_capacity_bytes", "vmem_size_bytes", "vmem_bytes"):
            val = getattr(info, name, None)
            if val:
                vmem_cap = int(val)
                break
    except Exception:
        vmem_cap = None
    if vmem_cap is None:
        vmem_cap = 64 * _MIB                 # conservative default: assume v7x
    if vmem_cap >= 100 * _MIB:               # v5e / v6e: 128 MiB physical VMEM
        return 8 * _MIB, 64 * _MIB
    return 4 * _MIB, 48 * _MIB               # v7x: 64 MiB physical VMEM


def _l1_epe_kernel(o_ref, t_ref, l1_ref, epe_ref, *,
                   sub, chunk, num_chunks, lanes, rows_valid, need_mask):
    """Per-block partial sums.

    o_ref, t_ref   : (C, SUB, LANES) input blocks (channel leading axis).
    l1_ref, epe_ref: (1, LANES) f32 per-block partial sums.
    """
    if need_mask:
        row0 = pl.program_id(1) * sub
        # Hoisted once per block; only the row (sublane) index matters.
        row_iota = jax.lax.broadcasted_iota(jnp.int32, (chunk, lanes), 0)

    def body(c, carry):
        l1_acc, epe_acc = carry
        start = c * chunk
        if chunk % 8 == 0:
            start = pl.multiple_of(start, 8)
        o = o_ref[:, pl.ds(start, chunk), :].astype(jnp.float32)
        t = t_ref[:, pl.ds(start, chunk), :].astype(jnp.float32)
        d = o - t                                         # (C, chunk, lanes)
        l1 = jnp.sum(jnp.abs(d), axis=0)                  # (chunk, lanes)  VPU
        epe = jnp.sqrt(jnp.sum(d * d, axis=0))            # (chunk, lanes)  VPU+EUP
        if need_mask:
            # Zero ragged-tail rows (garbage data of the partial last block)
            # before any cross-row mixing; NaN/Inf garbage is dropped by where.
            valid = (row0 + start + row_iota) < rows_valid
            l1 = jnp.where(valid, l1, 0.0)
            epe = jnp.where(valid, epe, 0.0)
        l1_acc = l1_acc + jnp.sum(l1, axis=0, keepdims=True)
        epe_acc = epe_acc + jnp.sum(epe, axis=0, keepdims=True)
        return l1_acc, epe_acc

    zero = jnp.zeros((1, lanes), jnp.float32)
    l1_acc, epe_acc = jax.lax.fori_loop(0, num_chunks, body, (zero, zero),
                                        unroll=(num_chunks <= 8))
    l1_ref[...] = l1_acc
    epe_ref[...] = epe_acc


def l1_loss_forward(output, target, mul_scale=1.0):
    """Pallas equivalent of L1Loss.forward(output, target) -> [L1, EPE]."""
    assert output.shape == target.shape
    N, C, H, W = output.shape
    HW = H * W
    itemsize = jnp.dtype(output.dtype).itemsize
    block_bytes, vmem_limit = _gen_params()

    # ---- layout: free reshapes only, never jnp.pad --------------------------
    if HW % LANE == 0:
        lanes, rows = LANE, HW // LANE
        o_in = output.reshape(N, C, rows, LANE)
        t_in = target.reshape(N, C, rows, LANE)
    else:
        lanes, rows = W, H                  # W is the full last dim -> allowed
        o_in, t_in = output, target
    lanes_phys = _cdiv(lanes, LANE) * LANE  # physical VMEM lane footprint

    # ---- tile sizing (static Python) -----------------------------------------
    sub_align = 8 * max(1, 4 // itemsize)   # packed sublane tile: 8/16/32
    if rows < sub_align:
        chunk = sub = rows                  # block row dim == full dim
        num_tiles = 1
    else:
        # Chunk ~128 sublanes of work across C per operand, aligned, <= rows.
        chunk = max(sub_align, ((LANE // max(C, 1)) // sub_align) * sub_align)
        chunk = min(chunk, (rows // sub_align) * sub_align)
        # Block rows from the per-input byte budget (physical lane footprint).
        sub_budget = (block_bytes // (C * lanes_phys * itemsize)) // chunk * chunk
        sub = min(max(chunk, sub_budget), (rows // chunk) * chunk)
        num_tiles = _cdiv(rows, sub)
        # v7x megacore: make sure the grid has >= 2 steps when the input allows.
        if N * num_tiles < 2 and rows // chunk >= 2:
            sub = min(_cdiv(_cdiv(rows, 2), chunk) * chunk,
                      (rows // chunk) * chunk)
            num_tiles = _cdiv(rows, sub)
    num_chunks = sub // chunk
    need_mask = num_tiles * sub > rows      # partial last block -> mask rows

    kernel = functools.partial(
        _l1_epe_kernel, sub=sub, chunk=chunk, num_chunks=num_chunks,
        lanes=lanes, rows_valid=rows, need_mask=need_mask)

    l1_parts, epe_parts = pl.pallas_call(
        kernel,
        out_shape=(
            jax.ShapeDtypeStruct((N, num_tiles, 1, lanes), jnp.float32),
            jax.ShapeDtypeStruct((N, num_tiles, 1, lanes), jnp.float32),
        ),
        grid=(N, num_tiles),
        in_specs=[
            pl.BlockSpec((None, C, sub, lanes), lambda n, t: (n, 0, t, 0)),
            pl.BlockSpec((None, C, sub, lanes), lambda n, t: (n, 0, t, 0)),
        ],
        out_specs=(
            pl.BlockSpec((None, None, 1, lanes), lambda n, t: (n, t, 0, 0)),
            pl.BlockSpec((None, None, 1, lanes), lambda n, t: (n, t, 0, 0)),
        ),
        compiler_params=pltpu.CompilerParams(
            dimension_semantics=("parallel", "parallel"),
            vmem_limit_bytes=vmem_limit,
        ),
    )(o_in, t_in)

    # Tiny final reduction in plain JAX (partials are small).
    mul = jnp.float32(float(mul_scale))
    l1_value = mul * jnp.sum(l1_parts) / jnp.float32(N * C * H * W)
    epe_value = mul * jnp.sum(epe_parts) / jnp.float32(N * H * W)
    return [l1_value, epe_value]


def _reference(output, target, mul_scale=1.0):
    l1 = mul_scale * jnp.mean(jnp.abs(output - target))
    epe = mul_scale * jnp.mean(
        jnp.sqrt(jnp.sum((target - output) ** 2, axis=1)))
    return l1, epe


if __name__ == "__main__":
    key = jax.random.PRNGKey(0)

    def _check(shape, tag):
        k1, k2 = jax.random.split(jax.random.fold_in(key, tag))
        out = jax.random.normal(k1, shape, dtype=jnp.float32)
        tgt = jax.random.normal(k2, shape, dtype=jnp.float32)
        l1_v, epe_v = l1_loss_forward(out, tgt, mul_scale=1.0)
        jax.block_until_ready(l1_v)
        jax.block_until_ready(epe_v)
        l1_r, epe_r = _reference(out, tgt, 1.0)
        assert jnp.allclose(l1_v, l1_r, rtol=1e-5, atol=1e-5), (shape, l1_v, l1_r)
        assert jnp.allclose(epe_v, epe_r, rtol=1e-5, atol=1e-5), (shape, epe_v, epe_r)

    _check((2, 4, 16, 16), 0)   # primary small shape: HW % 128 == 0, tiny rows
    _check((1, 2, 40, 32), 1)   # ragged row tail -> in-kernel mask, 2 tiles
    _check((2, 3, 10, 20), 2)   # HW % 128 != 0 -> native NCHW (W-lane) path + mask
    print("KERNEL_OK")
</pallas_src>

<mosaic_0001>
module attributes {stable_mosaic.version = 11 : i64} {
  func.func @_l1_epe_kernel(%arg0: i32, %arg1: i32, %arg2: memref<1x4x2x128xf32, #tpu.memory_space<vmem>>, %arg3: memref<1x4x2x128xf32, #tpu.memory_space<vmem>>, %arg4: memref<1x1x1x128xf32, #tpu.memory_space<vmem>>, %arg5: memref<1x1x1x128xf32, #tpu.memory_space<vmem>>) attributes {dimension_semantics = [#tpu.dimension_semantics<parallel>, #tpu.dimension_semantics<parallel>], iteration_bounds = array<i64: 2, 1>, scalar_prefetch = 0 : i64, scratch_operands = 0 : i64, tpu.core_type = #tpu.core_type<tc>, window_params = [{transform_indices = @transform_0, window_bounds = array<i64: 1, 4, 2, 128>}, {transform_indices = @transform_1, window_bounds = array<i64: 1, 4, 2, 128>}, {transform_indices = @transform_2, window_bounds = array<i64: 1, 1, 1, 128>}, {transform_indices = @transform_3, window_bounds = array<i64: 1, 1, 1, 128>}]} {
    %cst = arith.constant 0.000000e+00 : f32
    %0 = vector.broadcast %cst : f32 to vector<1x128xf32>
    %c0_i32 = arith.constant 0 : i32
    %c2_i32 = arith.constant 2 : i32
    %1 = arith.muli %c0_i32, %c2_i32 : i32
    %c0 = arith.constant 0 : index
    %c0_0 = arith.constant 0 : index
    %2 = arith.index_cast %1 : i32 to index
    %c0_1 = arith.constant 0 : index
    %3 = vector.load %arg2[%c0, %c0_0, %2, %c0_1] : memref<1x4x2x128xf32, #tpu.memory_space<vmem>>, vector<1x4x2x128xf32>
    %4 = vector.shape_cast %3 : vector<1x4x2x128xf32> to vector<4x2x128xf32>
    %c0_2 = arith.constant 0 : index
    %c0_3 = arith.constant 0 : index
    %5 = arith.index_cast %1 : i32 to index
    %c0_4 = arith.constant 0 : index
    %6 = vector.load %arg3[%c0_2, %c0_3, %5, %c0_4] : memref<1x4x2x128xf32, #tpu.memory_space<vmem>>, vector<1x4x2x128xf32>
    %7 = vector.shape_cast %6 : vector<1x4x2x128xf32> to vector<4x2x128xf32>
    %8 = arith.subf %4, %7 : vector<4x2x128xf32>
    %9 = math.absf %8 : vector<4x2x128xf32>
    %cst_5 = arith.constant dense<0.000000e+00> : vector<2x128xf32>
    %10 = vector.multi_reduction <add>, %9, %cst_5 [0] : vector<4x2x128xf32> to vector<2x128xf32>
    %11 = arith.mulf %8, %8 : vector<4x2x128xf32>
    %cst_6 = arith.constant dense<0.000000e+00> : vector<2x128xf32>
    %12 = vector.multi_reduction <add>, %11, %cst_6 [0] : vector<4x2x128xf32> to vector<2x128xf32>
    %13 = math.sqrt %12 : vector<2x128xf32>
    %cst_7 = arith.constant dense<0.000000e+00> : vector<128xf32>
    %14 = vector.multi_reduction <add>, %10, %cst_7 [0] : vector<2x128xf32> to vector<128xf32>
    %15 = vector.shape_cast %14 : vector<128xf32> to vector<1x128xf32>
    %16 = arith.addf %0, %15 : vector<1x128xf32>
    %cst_8 = arith.constant dense<0.000000e+00> : vector<128xf32>
    %17 = vector.multi_reduction <add>, %13, %cst_8 [0] : vector<2x128xf32> to vector<128xf32>
    %18 = vector.shape_cast %17 : vector<128xf32> to vector<1x128xf32>
    %19 = arith.addf %0, %18 : vector<1x128xf32>
    %c1_i32 = arith.constant 1 : i32
    %c0_9 = arith.constant 0 : index
    %c0_10 = arith.constant 0 : index
    %c0_11 = arith.constant 0 : index
    %c0_12 = arith.constant 0 : index
    %20 = vector.load %arg4[%c0_9, %c0_10, %c0_11, %c0_12] : memref<1x1x1x128xf32, #tpu.memory_space<vmem>>, vector<1x1x1x128xf32>
    %21 = vector.shape_cast %20 : vector<1x1x1x128xf32> to vector<1x128xf32>
    %22 = vector.shape_cast %16 : vector<1x128xf32> to vector<1x1x1x128xf32>
    tpu.vector_store %arg4[%c0_9, %c0_10, %c0_11, %c0_12], %22 {strides = array<i32>} : memref<1x1x1x128xf32, #tpu.memory_space<vmem>>, vector<1x1x1x128xf32>,
    %c0_13 = arith.constant 0 : index
    %c0_14 = arith.constant 0 : index
    %c0_15 = arith.constant 0 : index
    %c0_16 = arith.constant 0 : index
    %23 = vector.load %arg5[%c0_13, %c0_14, %c0_15, %c0_16] : memref<1x1x1x128xf32, #tpu.memory_space<vmem>>, vector<1x1x1x128xf32>
    %24 = vector.shape_cast %23 : vector<1x1x1x128xf32> to vector<1x128xf32>
    %25 = vector.shape_cast %19 : vector<1x128xf32> to vector<1x1x1x128xf32>
    tpu.vector_store %arg5[%c0_13, %c0_14, %c0_15, %c0_16], %25 {strides = array<i32>} : memref<1x1x1x128xf32, #tpu.memory_space<vmem>>, vector<1x1x1x128xf32>,
    return
  }
  func.func @transform_0(%arg0: i32, %arg1: i32) -> (i32, i32, i32, i32) {
    %c0_i32 = arith.constant 0 : i32
    %c0_i32_0 = arith.constant 0 : i32
    %c0_i32_1 = arith.constant 0 : i32
    return %arg0, %c0_i32, %arg1, %c0_i32_0 : i32, i32, i32, i32
  }
  func.func @transform_1(%arg0: i32, %arg1: i32) -> (i32, i32, i32, i32) {
    %c0_i32 = arith.constant 0 : i32
    %c0_i32_0 = arith.constant 0 : i32
    %c0_i32_1 = arith.constant 0 : i32
    return %arg0, %c0_i32, %arg1, %c0_i32_0 : i32, i32, i32, i32
  }
  func.func @transform_2(%arg0: i32, %arg1: i32) -> (i32, i32, i32, i32) {
    %c0_i32 = arith.constant 0 : i32
    %c0_i32_0 = arith.constant 0 : i32
    %c0_i32_1 = arith.constant 0 : i32
    return %arg0, %arg1, %c0_i32, %c0_i32_0 : i32, i32, i32, i32
  }
  func.func @transform_3(%arg0: i32, %arg1: i32) -> (i32, i32, i32, i32) {
    %c0_i32 = arith.constant 0 : i32
    %c0_i32_0 = arith.constant 0 : i32
    %c0_i32_1 = arith.constant 0 : i32
    return %arg0, %arg1, %c0_i32, %c0_i32_0 : i32, i32, i32, i32
  }
}

</mosaic_0001>

<llo_original>
// kernel: tpu_custom_call.1
$region0: #{tpu_custom_call.1}
  #allocation0 [shape = 'u32[]', space=smem, size = 0x4, offset = 0x4, fixed_abs, tag = 'smem constant byte address 0x4 - core index']
  #allocation1 [shape = 'u32[144,128]{1,0:T(1,128)}', space=vmem, size = 0x12000, scoped, tag = 'internal scratch']
  %s0 = inlined_call_operand.hbm [shape: f32[2,4,2,128], index: 0, kind: input, shape index: {}]
  %s1 = inlined_call_operand.hbm [shape: f32[2,4,2,128], index: 1, kind: input, shape index: {}]
  %s2 = inlined_call_operand.hbm [shape: f32[2,1,1,128], index: 2, kind: output, shape index: {0}]
  %s3 = inlined_call_operand.hbm [shape: f32[2,1,1,128], index: 3, kind: output, shape index: {1}]
  %4 = xla_tuple %s2, %s3
  %s5 = sld [smem:[#allocation0]]
  $region57: #{tpu_custom_call.1} parent=0
    _
  %s7 = ssub.s32 1, %s5
  %s8 = scalar_select 0, %s7, %s5
  $region1: #{tpu_custom_call.1} parent=0
    #allocation2 [shape = 'u8[8192]{0}', space=vmem, size = 0x2000, scoped, tag = 'input window, operand 0']
    #allocation3 [shape = 's32[2]{0}', space=sflag, size = 0x8, scoped, tag = 'scoped memory for tpu_custom_call.1']
    #allocation4 [shape = 's32[2]{0}', space=sflag, size = 0x8, scoped, tag = 'scoped memory for tpu_custom_call.1']
    #allocation5 [shape = 'u8[8192]{0}', space=vmem, size = 0x2000, scoped, tag = 'input window, operand 1']
    #allocation6 [shape = 's32[2]{0}', space=sflag, size = 0x8, scoped, tag = 'scoped memory for tpu_custom_call.1']
    #allocation7 [shape = 'u8[1024]{0}', space=vmem, size = 0x400, scoped, tag = 'output window, operand 0']
    #allocation8 [shape = 'u8[1024]{0}', space=vmem, size = 0x400, scoped, tag = 'output window, operand 1']
    #allocation9 [shape = 's32[2]{0}', space=sflag, size = 0x8, scoped, tag = 'scoped memory for tpu_custom_call.1']
    %9 = vsyncpa [#allocation3], 0
    %s10 = scalar_lea.sflag [#allocation3], 1
    %11 = vsyncpa %s10, 0
    %12 = vsyncpa [#allocation6], 0
    %s13 = scalar_lea.sflag [#allocation6], 1
    %14 = vsyncpa %s13, 0
    %15 = vsyncpa [#allocation4], 0
    %s16 = scalar_lea.sflag [#allocation4], 1
    %17 = vsyncpa %s16, 0
    %18 = vsyncpa [#allocation9], 0
    %s19 = scalar_lea.sflag [#allocation9], 1
    %20 = vsyncpa %s19, 0
    loop: start=0, step=1, limit=4
    $region2: #{tpu_custom_call.1} parent=1 // loop_pre_header
      _
    $region3: #{tpu_custom_call.1} parent=1 // loop_header
      %s22 = sphi 0, %s26
      %p23 = scmp.ge.s32.totalorder %s22, 4
      %s29 = sphi 0, %s41
      %s30 = sphi 0, %s37
      %s31 = sphi 0, %s29
      %s32 = sphi 0, %s30
      %s33 = sphi 0, %s31
      %s34 = sphi 0, %s32
      %s46 = sphi 0, %s48
      %s49 = sphi 0, %s46
      %s50 = sphi 0, %s49
      %s66 = sphi 0, %s50
      %s74 = sphi 0, %s76
      %s77 = sphi 0, %s74
      %s78 = sphi 0, %s77
      %s94 = sphi 0, %s78
      %s102 = sphi 0, %s104
      %s105 = sphi 0, %s102
      %s106 = sphi 0, %s105
      %s122 = sphi 0, %s106
      %s130 = sphi 0, %s132
      %s133 = sphi 0, %s130
      %s134 = sphi 0, %s133
      %s150 = sphi 0, %s134
    $region4: #{tpu_custom_call.1} parent=1 // loop_header_branch
      %25 = sbr.rel (%p23) target = $region8
    $region5: #{tpu_custom_call.1} parent=1 // loop_body
      %s27 = ssub.s32 %s22, 1
      %s28 = ssub.s32 %s22, 2
      %s35 = sadd.s32 1, %s30
      %p36 = scmp.ge.s32.totalorder %s35, 1
      %s37 = scalar_select %p36, 0, %s35
      %s38 = sadd.s32 1, %s29
      %s39 = scalar_select %p36, %s38, %s29
      %p40 = scmp.ge.s32.totalorder %s39, 2
      %s41 = scalar_select %p40, 0, %s39
      %s42 = ssub.s32 %s29, %s41
      %s43 = ssub.s32 %s30, %s37
      %s44 = sor.u32 %s42, %s43
      %p45 = scmp.eq.s32.totalorder %s44, 0
      %s47 = sadd.s32 %s46, 1
      %s48 = scalar_select %p45, %s46, %s47
      %p51 = pneg %p45
      %p52 = scmp.eq.s32.totalorder %s22, 1
      %p53 = por %p51, %p52
      %p54 = scmp.ne.s32.totalorder %s46, %s49
      %p55 = scmp.eq.s32.totalorder %s22, 0
      %p56 = por %p54, %p55
      %p57 = scmp.ne.s32.totalorder %s46, %s49
      %p58 = scmp.eq.s32.totalorder %s27, 1
      %p59 = por %p57, %p58
      %p60 = scmp.ne.s32.totalorder %s49, %s50
      %p61 = scmp.eq.s32.totalorder %s27, 0
      %p62 = por %p60, %p61
      %p63 = scmp.ne.s32.totalorder %s49, %s50
      %p64 = scmp.eq.s32.totalorder %s28, 1
      %p65 = por %p63, %p64
      %p67 = scmp.ne.s32.totalorder %s50, %s66
      %p68 = scmp.eq.s32.totalorder %s28, 0
      %p69 = por %p67, %p68
      %s70 = ssub.s32 %s29, %s41
      %s71 = ssub.s32 %s30, %s37
      %s72 = sor.u32 %s70, %s71
      %p73 = scmp.eq.s32.totalorder %s72, 0
      %s75 = sadd.s32 %s74, 1
      %s76 = scalar_select %p73, %s74, %s75
      %p79 = pneg %p73
      %p80 = scmp.eq.s32.totalorder %s22, 1
      %p81 = por %p79, %p80
      %p82 = scmp.ne.s32.totalorder %s74, %s77
      %p83 = scmp.eq.s32.totalorder %s22, 0
      %p84 = por %p82, %p83
      %p85 = scmp.ne.s32.totalorder %s74, %s77
      %p86 = scmp.eq.s32.totalorder %s27, 1
      %p87 = por %p85, %p86
      %p88 = scmp.ne.s32.totalorder %s77, %s78
      %p89 = scmp.eq.s32.totalorder %s27, 0
      %p90 = por %p88, %p89
      %p91 = scmp.ne.s32.totalorder %s77, %s78
      %p92 = scmp.eq.s32.totalorder %s28, 1
      %p93 = por %p91, %p92
      %p95 = scmp.ne.s32.totalorder %s78, %s94
      %p96 = scmp.eq.s32.totalorder %s28, 0
      %p97 = por %p95, %p96
      %s98 = ssub.s32 %s29, %s41
      %s99 = ssub.s32 %s30, %s37
      %s100 = sor.u32 %s98, %s99
      %p101 = scmp.eq.s32.totalorder %s100, 0
      %s103 = sadd.s32 %s102, 1
      %s104 = scalar_select %p101, %s102, %s103
      %p107 = pneg %p101
      %p108 = scmp.eq.s32.totalorder %s22, 1
      %p109 = por %p107, %p108
      %p110 = scmp.ne.s32.totalorder %s102, %s105
      %p111 = scmp.eq.s32.totalorder %s22, 0
      %p112 = por %p110, %p111
      %p113 = scmp.ne.s32.totalorder %s102, %s105
      %p114 = scmp.eq.s32.totalorder %s27, 1
      %p115 = por %p113, %p114
      %p116 = scmp.ne.s32.totalorder %s105, %s106
      %p117 = scmp.eq.s32.totalorder %s27, 0
      %p118 = por %p116, %p117
      %p119 = scmp.ne.s32.totalorder %s105, %s106
      %p120 = scmp.eq.s32.totalorder %s28, 1
      %p121 = por %p119, %p120
      %p123 = scmp.ne.s32.totalorder %s106, %s122
      %p124 = scmp.eq.s32.totalorder %s28, 0
      %p125 = por %p123, %p124
      %s126 = ssub.s32 %s29, %s41
      %s127 = ssub.s32 %s30, %s37
      %s128 = sor.u32 %s126, %s127
      %p129 = scmp.eq.s32.totalorder %s128, 0
      %s131 = sadd.s32 %s130, 1
      %s132 = scalar_select %p129, %s130, %s131
      %p135 = pneg %p129
      %p136 = scmp.eq.s32.totalorder %s22, 1
      %p137 = por %p135, %p136
      %p138 = scmp.ne.s32.totalorder %s130, %s133
      %p139 = scmp.eq.s32.totalorder %s22, 0
      %p140 = por %p138, %p139
      %p141 = scmp.ne.s32.totalorder %s130, %s133
      %p142 = scmp.eq.s32.totalorder %s27, 1
      %p143 = por %p141, %p142
      %p144 = scmp.ne.s32.totalorder %s133, %s134
      %p145 = scmp.eq.s32.totalorder %s27, 0
      %p146 = por %p144, %p145
      %p147 = scmp.ne.s32.totalorder %s133, %s134
      %p148 = scmp.eq.s32.totalorder %s28, 1
      %p149 = por %p147, %p148
      %p151 = scmp.ne.s32.totalorder %s134, %s150
      %p152 = scmp.eq.s32.totalorder %s28, 0
      %p153 = por %p151, %p152
      %p154 = scmp.le.s32.totalorder 1, %s22
      %p155 = scmp.lt.s32.totalorder %s22, 3
      %p156 = pnand %p154, %p155
      %p157 = pneg %p156
      // Predicated region
      $region9: #{tpu_custom_call.1} parent=5 // pred_check
        _
      $region10: #{tpu_custom_call.1} parent=5 // pred_check_branch
        %159 = sbr.rel (%p156) target = $region12
      $region11: #{tpu_custom_call.1} parent=5 // pred_region
        %s160 = ssub.s32 %s22, 1
      $region12: #{tpu_custom_call.1} parent=5 // pred_fallthru
        _
      %p161 = scmp.lt.s32.totalorder %s22, 2
      // Predicated region
      $region13: #{tpu_custom_call.1} parent=5 // pred_check
        %p162 = pneg %p161
      $region14: #{tpu_custom_call.1} parent=5 // pred_check_branch
        %164 = sbr.rel (%p162) target = $region16
      $region15: #{tpu_custom_call.1} parent=5 // pred_region
        // Predicated region
        $region17: #{tpu_custom_call.1} parent=15 // pred_check
          %p165 = pneg %p56
        $region18: #{tpu_custom_call.1} parent=15 // pred_check_branch
          %167 = sbr.rel (%p165) target = $region20
        $region19: #{tpu_custom_call.1} parent=15 // pred_region
          %s168 = sand.u32 %s46, 1
          %s169 = scalar_lea.sflag [#allocation3], %s168
          %s170 = sand.u32 %s46, 1
          %s171 = smul.addr %s170, 8
          %s172 = scalar_lea.vmem [#allocation2], %s171
          %s174 = ssub.s32 128, 128
          %175 = vsyncadd %s169, %s174
          %s176 = smul.addr %s29, 4
          %s177 = sadd.s32 %s30, %s176
          %s178 = smul.addr %s177, 32
          %s179 = scalar_lea.hbm %s0, %s178
          %s180 = sshll.u32 %s172, 4
          %s181 = int_to_ptr.vmem [resolvable:$true] %s180
          %186 = dma.hbm_to_vmem [thread:$0]  %s179, 128, %s181, %s169, 32, 32, 2
        $region20: #{tpu_custom_call.1} parent=15 // pred_fallthru
          _
        // Predicated region
        $region21: #{tpu_custom_call.1} parent=15 // pred_check
          %p187 = pneg %p84
        $region22: #{tpu_custom_call.1} parent=15 // pred_check_branch
          %189 = sbr.rel (%p187) target = $region24
        $region23: #{tpu_custom_call.1} parent=15 // pred_region
          %s190 = sand.u32 %s74, 1
          %s191 = scalar_lea.sflag [#allocation6], %s190
          %s192 = sand.u32 %s74, 1
          %s193 = smul.addr %s192, 8
          %s194 = scalar_lea.vmem [#allocation5], %s193
          %s196 = ssub.s32 128, 128
          %197 = vsyncadd %s191, %s196
          %s198 = smul.addr %s29, 4
          %s199 = sadd.s32 %s30, %s198
          %s200 = smul.addr %s199, 32
          %s201 = scalar_lea.hbm %s1, %s200
          %s202 = sshll.u32 %s194, 4
          %s203 = int_to_ptr.vmem [resolvable:$true] %s202
          %208 = dma.hbm_to_vmem [thread:$0]  %s201, 128, %s203, %s191, 32, 32, 2
        $region24: #{tpu_custom_call.1} parent=15 // pred_fallthru
          _
      $region16: #{tpu_custom_call.1} parent=5 // pred_fallthru
        _
      %p209 = scmp.le.s32.totalorder 1, %s22
      %p210 = scmp.lt.s32.totalorder %s22, 3
      %p211 = pnand %p209, %p210
      %p212 = pneg %p211
      // Predicated region
      $region25: #{tpu_custom_call.1} parent=5 // pred_check
        _
      $region26: #{tpu_custom_call.1} parent=5 // pred_check_branch
        %214 = sbr.rel (%p211) target = $region28
      $region27: #{tpu_custom_call.1} parent=5 // pred_region
        %s215 = ssub.s32 %s22, 1
        %s216 = sand.u32 %s49, 1
        %s217 = scalar_lea.sflag [#allocation3], %s216
        %s218 = sand.u32 %s49, 1
        %s219 = smul.addr %s218, 8
        %s220 = scalar_lea.vmem [#allocation2], %s219
        // Predicated region
        $region29: #{tpu_custom_call.1} parent=27 // pred_check
          %p221 = pneg %p62
        $region30: #{tpu_custom_call.1} parent=27 // pred_check_branch
          %223 = sbr.rel (%p221) target = $region32
        $region31: #{tpu_custom_call.1} parent=27 // pred_region
          %224 = dma.done %s217, 128
        $region32: #{tpu_custom_call.1} parent=27 // pred_fallthru
          _
        %s225 = sand.u32 %s77, 1
        %s226 = scalar_lea.sflag [#allocation6], %s225
        %s227 = sand.u32 %s77, 1
        %s228 = smul.addr %s227, 8
        %s229 = scalar_lea.vmem [#allocation5], %s228
        // Predicated region
        $region33: #{tpu_custom_call.1} parent=27 // pred_check
          %p230 = pneg %p90
        $region34: #{tpu_custom_call.1} parent=27 // pred_check_branch
          %232 = sbr.rel (%p230) target = $region36
        $region35: #{tpu_custom_call.1} parent=27 // pred_region
          %233 = dma.done %s226, 128
        $region36: #{tpu_custom_call.1} parent=27 // pred_fallthru
          _
        %s234 = sand.u32 %s49, 1
        %s235 = scalar_lea.sflag [#allocation3], %s234
        %s236 = sand.u32 %s49, 1
        %s237 = smul.addr %s236, 8
        %s238 = scalar_lea.vmem [#allocation2], %s237
        %p239 = pneg %p62
        %p240 = pneg %p59
        %s241 = sand.u32 %s77, 1
        %s242 = scalar_lea.sflag [#allocation6], %s241
        %s243 = sand.u32 %s77, 1
        %s244 = smul.addr %s243, 8
        %s245 = scalar_lea.vmem [#allocation5], %s244
        %p246 = pneg %p90
        %p247 = pneg %p87
        %p248 = pneg %p118
        %p249 = pneg %p115
        %s250 = sand.u32 %s105, 1
        %s251 = scalar_lea.sflag [#allocation4], %s250
        %s252 = sand.u32 %s105, 1
        %s253 = scalar_lea.vmem [#allocation7], %s252
        %p254 = pneg %p146
        %p255 = pneg %p143
        %s256 = sand.u32 %s133, 1
        %s257 = scalar_lea.sflag [#allocation9], %s256
        %s258 = sand.u32 %s133, 1
        %s259 = scalar_lea.vmem [#allocation8], %s258
        %v260 = vld [vmem:[%s220] sm:$0x3]
        %v261 = vld [vmem:[%s220 + $0x2] sm:$0x3]
        %v262 = vld [vmem:[%s220 + $0x4] sm:$0x3]
        %v263 = vld [vmem:[%s220 + $0x6] sm:$0x3]
        %v264 = vld [vmem:[%s229] sm:$0x3]
        %v265 = vld [vmem:[%s229 + $0x2] sm:$0x3]
        %v266 = vld [vmem:[%s229 + $0x4] sm:$0x3]
        %v267 = vld [vmem:[%s229 + $0x6] sm:$0x3]
        %v268 = vsub.f32 %v260, %v264
        %v269 = vsub.f32 %v261, %v265
        %v270 = vsub.f32 %v262, %v266
        %v271 = vsub.f32 %v263, %v267
        %v272 = vand.u32 2147483647, %v268
        %v273 = vand.u32 2147483647, %v269
        %v274 = vand.u32 2147483647, %v270
        %v275 = vand.u32 2147483647, %v271
        %vm276 = vcmask 1041408
        %v277 = vsel %vm276, %v272, 0.0
        %v278 = vsel %vm276, %v273, 0.0
        %v279 = vadd.f32 %v277, %v278
        %v280 = vsel %vm276, %v274, 0.0
        %v281 = vadd.f32 %v279, %v280
        %v282 = vsel %vm276, %v275, 0.0
        %v283 = vadd.f32 %v281, %v282
        %v284 = vmul.f32 %v268, %v268
        %v285 = vmul.f32 %v269, %v269
        %v286 = vmul.f32 %v270, %v270
        %v287 = vmul.f32 %v271, %v271
        %v288 = vsel %vm276, %v284, 0.0
        %v289 = vsel %vm276, %v285, 0.0
        %v290 = vadd.f32 %v288, %v289
        %v291 = vsel %vm276, %v286, 0.0
        %v292 = vadd.f32 %v290, %v291
        %v293 = vsel %vm276, %v287, 0.0
        %v294 = vadd.f32 %v292, %v293
        %v295 = vrsqrt.pop %v294
        %v296 = vmul.f32 %v294, %v295
        %vm297 = vcmp.eq.f32.partialorder %v294, inf
        %v298 = vsel %vm297, %v294, %v296
        %vm299 = vcmp.eq.f32.partialorder %v294, 0.0
        %v300 = vand.u32 %v294, 2147483648
        %v301 = vsel %vm299, %v300, %v298
        %v302 = vsel %vm276, %v283, 0.0
        %v303 = vrot.slane %v302, 4
        %v304 = vadd.f32 %v302, %v303
        %v305 = vrot.slane %v304, 2
        %v306 = vadd.f32 %v304, %v305
        %v307 = vrot.slane %v306, 1
        %v308 = vadd.f32 %v306, %v307
        %v309 = vadd.f32 %v308, 0.0
        %v310 = vsel %vm276, %v301, 0.0
        %v311 = vrot.slane %v310, 4
        %v312 = vadd.f32 %v310, %v311
        %v313 = vrot.slane %v312, 2
        %v314 = vadd.f32 %v312, %v313
        %v315 = vrot.slane %v314, 1
        %v316 = vadd.f32 %v314, %v315
        %v317 = vadd.f32 %v316, 0.0
        %318 = vst [vmem:[%s253] sm:$0x1] %v309
        %319 = vst [vmem:[%s259] sm:$0x1] %v317
        %s320 = sand.u32 %s105, 1
        %s321 = scalar_lea.sflag [#allocation4], %s320
        %s322 = sand.u32 %s105, 1
        %s323 = scalar_lea.vmem [#allocation7], %s322
        %s324 = sand.u32 %s133, 1
        %s325 = scalar_lea.sflag [#allocation9], %s324
        %s326 = sand.u32 %s133, 1
        %s327 = scalar_lea.vmem [#allocation8], %s326
        // Predicated region
        $region37: #{tpu_custom_call.1} parent=27 // pred_check
          %p328 = pneg %p115
        $region38: #{tpu_custom_call.1} parent=27 // pred_check_branch
          %330 = sbr.rel (%p328) target = $region40
        $region39: #{tpu_custom_call.1} parent=27 // pred_region
          %s332 = ssub.s32 16, 16
          %333 = vsyncadd %s321, %s332
          %s334 = sadd.s32 %s32, %s31
          %s335 = smul.addr %s334, 16
          %s336 = scalar_lea.hbm %s2, %s335
          %s338 = sshll.u32 %s323, 4
          %s339 = int_to_ptr.vmem [resolvable:$true] %s338
          %341 = dma.vmem_to_hbm [thread:$0]  %s339, 16, %s336, %s321
        $region40: #{tpu_custom_call.1} parent=27 // pred_fallthru
          _
        // Predicated region
        $region41: #{tpu_custom_call.1} parent=27 // pred_check
          %p342 = pneg %p143
        $region42: #{tpu_custom_call.1} parent=27 // pred_check_branch
          %344 = sbr.rel (%p342) target = $region44
        $region43: #{tpu_custom_call.1} parent=27 // pred_region
          %s346 = ssub.s32 16, 16
          %347 = vsyncadd %s325, %s346
          %s348 = sadd.s32 %s32, %s31
          %s349 = smul.addr %s348, 16
          %s350 = scalar_lea.hbm %s3, %s349
          %s352 = sshll.u32 %s327, 4
          %s353 = int_to_ptr.vmem [resolvable:$true] %s352
          %355 = dma.vmem_to_hbm [thread:$0]  %s353, 16, %s350, %s325
        $region44: #{tpu_custom_call.1} parent=27 // pred_fallthru
          _
      $region28: #{tpu_custom_call.1} parent=5 // pred_fallthru
        _
      %p356 = scmp.le.s32.totalorder 2, %s22
      // Predicated region
      $region45: #{tpu_custom_call.1} parent=5 // pred_check
        %p357 = pneg %p356
      $region46: #{tpu_custom_call.1} parent=5 // pred_check_branch
        %359 = sbr.rel (%p357) target = $region48
      $region47: #{tpu_custom_call.1} parent=5 // pred_region
        %s360 = ssub.s32 %s22, 2
        // Predicated region
        $region49: #{tpu_custom_call.1} parent=47 // pred_check
          %p361 = pneg %p121
        $region50: #{tpu_custom_call.1} parent=47 // pred_check_branch
          %363 = sbr.rel (%p361) target = $region52
        $region51: #{tpu_custom_call.1} parent=47 // pred_region
          %s364 = sand.u32 %s106, 1
          %s365 = scalar_lea.sflag [#allocation4], %s364
          %s366 = sand.u32 %s106, 1
          %s367 = scalar_lea.vmem [#allocation7], %s366
          %368 = dma.done %s365, 16
        $region52: #{tpu_custom_call.1} parent=47 // pred_fallthru
          _
        // Predicated region
        $region53: #{tpu_custom_call.1} parent=47 // pred_check
          %p369 = pneg %p149
        $region54: #{tpu_custom_call.1} parent=47 // pred_check_branch
          %371 = sbr.rel (%p369) target = $region56
        $region55: #{tpu_custom_call.1} parent=47 // pred_region
          %s372 = sand.u32 %s134, 1
          %s373 = scalar_lea.sflag [#allocation9], %s372
          %s374 = sand.u32 %s134, 1
          %s375 = scalar_lea.vmem [#allocation8], %s374
          %376 = dma.done %s373, 16
        $region56: #{tpu_custom_call.1} parent=47 // pred_fallthru
          _
      $region48: #{tpu_custom_call.1} parent=5 // pred_fallthru
        _
    $region6: #{tpu_custom_call.1} parent=1 // loop_footer
      %s26 = sadd.s32 1, %s22
    $region7: #{tpu_custom_call.1} parent=1 // loop_footer_branch
      %21 = sbr.rel target = $region3
    $region8: #{tpu_custom_call.1} parent=1 // loop_exit
      _
    %377 = vsyncpa [#allocation3], 1
    %s378 = scalar_lea.sflag [#allocation3], 1
    %379 = vsyncpa %s378, 1
    %380 = vsyncpa [#allocation6], 1
    %s381 = scalar_lea.sflag [#allocation6], 1
    %382 = vsyncpa %s381, 1
    %383 = vsyncpa [#allocation4], 1
    %s384 = scalar_lea.sflag [#allocation4], 1
    %385 = vsyncpa %s384, 1
    %386 = vsyncpa [#allocation9], 1
    %s387 = scalar_lea.sflag [#allocation9], 1
    %388 = vsyncpa %s387, 1

</llo_original>
